<compile_context>
chip_gen: v7x
topology: tpu7x:2x2x1
jax: 0.10.0
libtpu: 0.0.40
codegen_flags: <defaults>
</compile_context>

<pallas_src>
import functools

import jax
import jax.numpy as jnp
from jax.experimental import pallas as pl
from jax.experimental.pallas import tpu as pltpu


def _round_up(x, m):
    return (x + m - 1) // m * m


def _cdiv(a, b):
    return -(-a // b)


# ------------------------------ tile policy ---------------------------------

_VMEM_TILE_BUDGET = 20 * 1024 * 1024   # double-buffered working set (all gens)
_VMEM_LIMIT_BYTES = 40 * 1024 * 1024   # scoped VMEM limit, safe on v5e/v6e/v7x
_TM_MAX = 256


def _choose_tn_tk(K, N, in_bytes=2, out_bytes=4):
    """Pick lane-aligned (tn, tk); depends only on the constant vote matrix."""
    Np = _round_up(N, 128)
    # Prefer >=2 tiles along the sphere axis so the outermost "parallel" grid
    # dim can shard across TensorCores (v7x megacore); cap the lane tile at 512.
    if Np <= 128:
        tn = Np
    else:
        tn = max(128, min(512, _round_up(Np // 2, 128)))

    Kp = _round_up(K, 128)

    def fits(tk):
        work = 2 * (_TM_MAX * tk + tk * tn) * in_bytes   # double-buffered inputs
        work += 2 * _TM_MAX * tn * out_bytes             # double-buffered f32 out
        return work <= _VMEM_TILE_BUDGET

    # Largest 128-multiple K tile that fits (full K when possible keeps the
    # vote tile VMEM-resident across the batch*channel loop) ...
    tk_max = min(Kp, 8192)
    while tk_max > 128 and not fits(tk_max):
        tk_max -= 128
    # ... then balance the K tiles so zero-padding along K is minimal.
    n_k = _cdiv(Kp, tk_max)
    tk = _round_up(_cdiv(Kp, n_k), 128)
    return tn, tk


def _choose_tm(M):
    # Multiples of 16: bf16 input packs 16 sublanes/vreg, f32 output needs 8.
    m16 = _round_up(M, 16)
    if m16 <= _TM_MAX:
        return m16                      # single tile along M (full padded dim)
    cands = (256, 128, 64, 32, 16)
    return min(cands, key=lambda t: (_round_up(M, t), -t))


# ------------------------------ Pallas kernel --------------------------------

def _sphere_matmul_kernel(x_ref, m_ref, o_ref):
    """Accumulate one (tm, tn) f32 output tile directly, reducing over K."""
    @pl.when(pl.program_id(2) == 0)
    def _():
        o_ref[...] = jnp.zeros_like(o_ref)

    o_ref[...] += jnp.dot(
        x_ref[...], m_ref[...], preferred_element_type=jnp.float32
    )


@functools.partial(jax.jit, static_argnames=("tm", "tn", "tk"))
def _sphere_matmul(x_flat, vote_matrix, *, tm, tn, tk):
    """x_flat: [Mp, Kp] bf16, vote_matrix: [Kp, Np] bf16 -> [Mp, Np] f32."""
    Mp, Kp = x_flat.shape
    Kp2, Np = vote_matrix.shape
    assert Kp == Kp2
    assert Mp % tm == 0 and Np % tn == 0 and Kp % tk == 0

    cost = pl.CostEstimate(
        flops=2 * Mp * Kp * Np,
        transcendentals=0,
        bytes_accessed=(Mp * Kp * x_flat.dtype.itemsize
                        + Kp * Np * vote_matrix.dtype.itemsize
                        + Mp * Np * 4),
    )

    # Grid: sphere tiles (parallel, outermost) x row tiles (parallel) x K
    # (reduction, innermost).  With a full-K vote block its index (0, j) is
    # constant across the row loop, so Pallas skips its re-DMA (VMEM-resident).
    return pl.pallas_call(
        _sphere_matmul_kernel,
        out_shape=jax.ShapeDtypeStruct((Mp, Np), jnp.float32),
        grid_spec=pltpu.PrefetchScalarGridSpec(
            num_scalar_prefetch=0,
            grid=(Np // tn, Mp // tm, Kp // tk),
            in_specs=[
                pl.BlockSpec((tm, tk), lambda j, i, k: (i, k)),
                pl.BlockSpec((tk, tn), lambda j, i, k: (k, j)),
            ],
            out_specs=pl.BlockSpec((tm, tn), lambda j, i, k: (i, j)),
        ),
        compiler_params=pltpu.CompilerParams(
            dimension_semantics=("parallel", "parallel", "arbitrary"),
            vmem_limit_bytes=_VMEM_LIMIT_BYTES,
        ),
        cost_estimate=cost,
    )(x_flat, vote_matrix)


# ---------------------------- Module equivalent -------------------------------

class SpherePallas:
    """JAX/Pallas equivalent of SPHERE_CUDA.

    vote_mapping: float array [num_votes, 3]
        [:, 0] flat HT index (< ht_size[0]*ht_size[1])
        [:, 1] sphere point index (< sphere_size)
        [:, 2] weight
    """

    def __init__(self, vote_mapping_dict):
        vote_mapping = jnp.asarray(vote_mapping_dict["vote_mapping"])
        self.num_votes = vote_mapping.shape[0]
        ht_size = vote_mapping_dict["ht_size"]
        self.ht_size = ((ht_size, ht_size) if isinstance(ht_size, int)
                        else tuple(ht_size))
        self.sphere_size = int(vote_mapping_dict["sphere_size"])

        ht_idx = vote_mapping[:, 0].astype(jnp.int32)
        sp_idx = vote_mapping[:, 1].astype(jnp.int32)
        weights = vote_mapping[:, 2].astype(jnp.float32)

        hw = self.ht_size[0] * self.ht_size[1]
        assert int(jnp.max(ht_idx)) < hw, "vote_mapping max ind >= ht_size"
        assert int(jnp.max(sp_idx)) < self.sphere_size, \
            "vote_mapping max ind >= sphere_size"

        # Init-time precalculation: dense vote matrix [H*W, sphere_size],
        # padded once to the kernel tile grid and stored in bf16 (dominant
        # HBM stream; kernel accumulation stays f32).
        # TODO(synk): optional int8 + per-column-scale vote matrix for v5e/v6e.
        vote_f32 = (
            jnp.zeros((hw, self.sphere_size), jnp.float32)
            .at[ht_idx, sp_idx]
            .add(weights)
        )
        self.hw = hw
        self.tn, self.tk = _choose_tn_tk(hw, self.sphere_size)
        self.k_pad = _round_up(hw, self.tk)
        self.n_pad = _round_up(self.sphere_size, self.tn)
        self.vote_matrix = jnp.pad(
            vote_f32,
            ((0, self.k_pad - hw), (0, self.n_pad - self.sphere_size)),
        ).astype(jnp.bfloat16)
        self.vote_matrix = jax.block_until_ready(self.vote_matrix)

    def __call__(self, x):
        batch, channel, h, w = x.shape
        assert channel % 4 == 0
        assert (h, w) == self.ht_size
        # The PyTorch view(batch*4, channel//4, h, w) only regroups the leading
        # axes; flatten directly to rows = batch*channel, lanes = h*w so the
        # K dimension stays lane-contiguous for the input DMA.
        x_flat = x.reshape(batch * channel, h * w).astype(jnp.bfloat16)

        M = batch * channel
        tm = _choose_tm(M)
        m_pad = _round_up(M, tm)
        if m_pad != M or self.k_pad != self.hw:
            x_flat = jnp.pad(
                x_flat, ((0, m_pad - M), (0, self.k_pad - self.hw))
            )

        out = _sphere_matmul(
            x_flat, self.vote_matrix, tm=tm, tn=self.tn, tk=self.tk
        )
        out = out[:M, :self.sphere_size].astype(x.dtype)
        return out.reshape(batch, channel, self.sphere_size)


# ----------------------------------- main -------------------------------------

if __name__ == "__main__":
    key = jax.random.PRNGKey(0)
    k_x, k_ht, k_sp, k_w = jax.random.split(key, 4)

    batch, channel, h, w = 2, 4, 16, 16         # h*w = 256
    sphere_size = 256
    num_votes = 1024

    # Deterministic synthetic vote_mapping (the "precalculation" input).
    ht_idx = jax.random.randint(k_ht, (num_votes,), 0, h * w)
    sp_idx = jax.random.randint(k_sp, (num_votes,), 0, sphere_size)
    weights = jax.random.uniform(k_w, (num_votes,), jnp.float32)
    vote_mapping = jnp.stack(
        [ht_idx.astype(jnp.float32), sp_idx.astype(jnp.float32), weights], axis=1
    )

    sphere = SpherePallas(
        {"vote_mapping": vote_mapping, "ht_size": (h, w), "sphere_size": sphere_size}
    )

    x = jax.random.normal(k_x, (batch, channel, h, w), jnp.float32)

    out = sphere(x)
    out = jax.block_until_ready(out)

    # Reference check (plain JAX) against the same bf16-rounded operands with
    # f32 accumulation: out[b,c,s] = sum_hw x[b,c,hw] * M[hw,s]
    x_bf = x.astype(jnp.bfloat16).astype(jnp.float32)
    vm_bf = sphere.vote_matrix[: h * w, :sphere_size].astype(jnp.float32)
    ref = jnp.einsum("bck,ks->bcs", x_bf.reshape(batch, channel, h * w), vm_bf)

    assert out.shape == (batch, channel, sphere_size)
    assert jnp.allclose(out, ref, atol=2e-3, rtol=2e-3)

    print("KERNEL_OK")
</pallas_src>

<mosaic_0001>
module attributes {stable_mosaic.version = 11 : i64} {
  func.func @_sphere_matmul_kernel(%arg0: i32, %arg1: i32, %arg2: i32, %arg3: memref<16x256xbf16, #tpu.memory_space<vmem>>, %arg4: memref<256x128xbf16, #tpu.memory_space<vmem>>, %arg5: memref<16x128xf32, #tpu.memory_space<vmem>>) attributes {dimension_semantics = [#tpu.dimension_semantics<parallel>, #tpu.dimension_semantics<parallel>, #tpu.dimension_semantics<arbitrary>], iteration_bounds = array<i64: 2, 1, 1>, scalar_prefetch = 0 : i64, scratch_operands = 0 : i64, tpu.core_type = #tpu.core_type<tc>, window_params = [{transform_indices = @transform_0, window_bounds = array<i64: 16, 256>}, {transform_indices = @transform_1, window_bounds = array<i64: 256, 128>}, {transform_indices = @transform_2, window_bounds = array<i64: 16, 128>}]} {
    %c0_i32 = arith.constant 0 : i32
    %0 = arith.cmpi eq, %arg2, %c0_i32 : i32
    %1 = arith.extui %0 : i1 to i32
    %c0_i32_0 = arith.constant 0 : i32
    %2 = arith.cmpi ne, %1, %c0_i32_0 : i32
    scf.if %2 {
      %cst_8 = arith.constant 0.000000e+00 : f32
      %9 = vector.broadcast %cst_8 : f32 to vector<16x128xf32>
      %c0_9 = arith.constant 0 : index
      %c0_10 = arith.constant 0 : index
      %10 = vector.load %arg5[%c0_9, %c0_10] : memref<16x128xf32, #tpu.memory_space<vmem>>, vector<16x128xf32>
      tpu.vector_store %arg5[%c0_9, %c0_10], %9 {strides = array<i32>} : memref<16x128xf32, #tpu.memory_space<vmem>>, vector<16x128xf32>,
    } else {
    }
    %c0 = arith.constant 0 : index
    %c0_1 = arith.constant 0 : index
    %3 = vector.load %arg5[%c0, %c0_1] : memref<16x128xf32, #tpu.memory_space<vmem>>, vector<16x128xf32>
    %c0_2 = arith.constant 0 : index
    %c0_3 = arith.constant 0 : index
    %4 = vector.load %arg3[%c0_2, %c0_3] : memref<16x256xbf16, #tpu.memory_space<vmem>>, vector<16x256xbf16>
    %c0_4 = arith.constant 0 : index
    %c0_5 = arith.constant 0 : index
    %5 = vector.load %arg4[%c0_4, %c0_5] : memref<256x128xbf16, #tpu.memory_space<vmem>>, vector<256x128xbf16>
    %cst = arith.constant dense<0.000000e+00> : vector<16x128xf32>
    %6 = tpu.matmul %4, %5, %cst {dimension_numbers = #tpu.dot_dimension_numbers<[1], [0], [0], [1], [0, 0, 1, 1], [], []>} : vector<16x256xbf16>, vector<256x128xbf16>, vector<16x128xf32> -> vector<16x128xf32>
    %7 = arith.addf %3, %6 : vector<16x128xf32>
    %c0_6 = arith.constant 0 : index
    %c0_7 = arith.constant 0 : index
    %8 = vector.load %arg5[%c0_6, %c0_7] : memref<16x128xf32, #tpu.memory_space<vmem>>, vector<16x128xf32>
    tpu.vector_store %arg5[%c0_6, %c0_7], %7 {strides = array<i32>} : memref<16x128xf32, #tpu.memory_space<vmem>>, vector<16x128xf32>,
    return
  }
  func.func @transform_0(%arg0: i32, %arg1: i32, %arg2: i32) -> (i32, i32) {
    %c0_i32 = arith.constant 0 : i32
    return %arg1, %arg2 : i32, i32
  }
  func.func @transform_1(%arg0: i32, %arg1: i32, %arg2: i32) -> (i32, i32) {
    %c0_i32 = arith.constant 0 : i32
    return %arg2, %arg0 : i32, i32
  }
  func.func @transform_2(%arg0: i32, %arg1: i32, %arg2: i32) -> (i32, i32) {
    %c0_i32 = arith.constant 0 : i32
    return %arg1, %arg0 : i32, i32
  }
}

</mosaic_0001>

<llo_original>
// kernel: _sphere_matmul.1
$region0: #{_sphere_matmul.1}
  #allocation0 [shape = 'u32[]', space=smem, size = 0x4, offset = 0x4, fixed_abs, tag = 'smem constant byte address 0x4 - core index']
  #allocation1 [shape = 'u32[144,128]{1,0:T(1,128)}', space=vmem, size = 0x12000, scoped, tag = 'internal scratch']
  %s0 = inlined_call_operand.hbm [shape: bf16[16,256], index: 0, kind: input, shape index: {}]
  %s1 = inlined_call_operand.hbm [shape: bf16[256,256], index: 1, kind: input, shape index: {}]
  %s2 = inlined_call_operand.hbm [shape: f32[16,256], index: 2, kind: output, shape index: {}]
  %s3 = sld [smem:[#allocation0]]
  $region53: #{_sphere_matmul.1} parent=0
    _
  %s5 = ssub.s32 1, %s3
  %s6 = scalar_select 0, %s5, %s3
  $region1: #{_sphere_matmul.1} parent=0
    #allocation2 [shape = 'u8[8192]{0}', space=vmem, size = 0x2000, scoped, tag = 'input window, operand 0, single buffered']
    #allocation3 [shape = 's32[2]{0}', space=sflag, size = 0x8, scoped, tag = 'scoped memory for _sphere_matmul.1']
    #allocation4 [shape = 's32[2]{0}', space=sflag, size = 0x8, scoped, tag = 'scoped memory for _sphere_matmul.1']
    #allocation5 [shape = 'u8[131072]{0}', space=vmem, size = 0x20000, scoped, tag = 'input window, operand 1']
    #allocation6 [shape = 's32[2]{0}', space=sflag, size = 0x8, scoped, tag = 'scoped memory for _sphere_matmul.1']
    #allocation7 [shape = 'u8[16384]{0}', space=vmem, size = 0x4000, scoped, tag = 'output window, operand 0']
    %7 = vsyncpa [#allocation3], 0
    %8 = vsyncpa [#allocation6], 0
    %s9 = scalar_lea.sflag [#allocation6], 1
    %10 = vsyncpa %s9, 0
    %11 = vsyncpa [#allocation4], 0
    %s12 = scalar_lea.sflag [#allocation4], 1
    %13 = vsyncpa %s12, 0
    loop: start=0, step=1, limit=4
    $region2: #{_sphere_matmul.1} parent=1 // loop_pre_header
      _
    $region3: #{_sphere_matmul.1} parent=1 // loop_header
      %s15 = sphi 0, %s19
      %p16 = scmp.ge.s32.totalorder %s15, 4
      %s22 = sphi 0, %s41
      %s23 = sphi 0, %s37
      %s24 = sphi 0, %s33
      %s25 = sphi 0, %s22
      %s26 = sphi 0, %s23
      %s27 = sphi 0, %s24
      %s28 = sphi 0, %s25
      %s29 = sphi 0, %s26
      %s30 = sphi 0, %s27
      %s46 = sphi 0, %s48
      %s49 = sphi 0, %s46
      %s50 = sphi 0, %s49
      %s66 = sphi 0, %s50
      %s74 = sphi 0, %s76
      %s77 = sphi 0, %s74
      %s78 = sphi 0, %s77
      %s94 = sphi 0, %s78
      %s102 = sphi 0, %s104
      %s105 = sphi 0, %s102
      %s106 = sphi 0, %s105
      %s122 = sphi 0, %s106
    $region4: #{_sphere_matmul.1} parent=1 // loop_header_branch
      %18 = sbr.rel (%p16) target = $region8
    $region5: #{_sphere_matmul.1} parent=1 // loop_body
      %s20 = ssub.s32 %s15, 1
      %s21 = ssub.s32 %s15, 2
      %s31 = sadd.s32 1, %s24
      %p32 = scmp.ge.s32.totalorder %s31, 1
      %s33 = scalar_select %p32, 0, %s31
      %s34 = sadd.s32 1, %s23
      %s35 = scalar_select %p32, %s34, %s23
      %p36 = scmp.ge.s32.totalorder %s35, 1
      %s37 = scalar_select %p36, 0, %s35
      %s38 = sadd.s32 1, %s22
      %s39 = scalar_select %p36, %s38, %s22
      %p40 = scmp.ge.s32.totalorder %s39, 2
      %s41 = scalar_select %p40, 0, %s39
      %s42 = ssub.s32 %s23, %s37
      %s43 = ssub.s32 %s24, %s33
      %s44 = sor.u32 %s42, %s43
      %p45 = scmp.eq.s32.totalorder %s44, 0
      %s47 = sadd.s32 %s46, 1
      %s48 = scalar_select %p45, %s46, %s47
      %p51 = pneg %p45
      %p52 = scmp.eq.s32.totalorder %s15, 1
      %p53 = por %p51, %p52
      %p54 = scmp.ne.s32.totalorder %s46, %s49
      %p55 = scmp.eq.s32.totalorder %s15, 0
      %p56 = por %p54, %p55
      %p57 = scmp.ne.s32.totalorder %s46, %s49
      %p58 = scmp.eq.s32.totalorder %s20, 1
      %p59 = por %p57, %p58
      %p60 = scmp.ne.s32.totalorder %s49, %s50
      %p61 = scmp.eq.s32.totalorder %s20, 0
      %p62 = por %p60, %p61
      %p63 = scmp.ne.s32.totalorder %s49, %s50
      %p64 = scmp.eq.s32.totalorder %s21, 1
      %p65 = por %p63, %p64
      %p67 = scmp.ne.s32.totalorder %s50, %s66
      %p68 = scmp.eq.s32.totalorder %s21, 0
      %p69 = por %p67, %p68
      %s70 = ssub.s32 %s24, %s33
      %s71 = ssub.s32 %s22, %s41
      %s72 = sor.u32 %s70, %s71
      %p73 = scmp.eq.s32.totalorder %s72, 0
      %s75 = sadd.s32 %s74, 1
      %s76 = scalar_select %p73, %s74, %s75
      %p79 = pneg %p73
      %p80 = scmp.eq.s32.totalorder %s15, 1
      %p81 = por %p79, %p80
      %p82 = scmp.ne.s32.totalorder %s74, %s77
      %p83 = scmp.eq.s32.totalorder %s15, 0
      %p84 = por %p82, %p83
      %p85 = scmp.ne.s32.totalorder %s74, %s77
      %p86 = scmp.eq.s32.totalorder %s20, 1
      %p87 = por %p85, %p86
      %p88 = scmp.ne.s32.totalorder %s77, %s78
      %p89 = scmp.eq.s32.totalorder %s20, 0
      %p90 = por %p88, %p89
      %p91 = scmp.ne.s32.totalorder %s77, %s78
      %p92 = scmp.eq.s32.totalorder %s21, 1
      %p93 = por %p91, %p92
      %p95 = scmp.ne.s32.totalorder %s78, %s94
      %p96 = scmp.eq.s32.totalorder %s21, 0
      %p97 = por %p95, %p96
      %s98 = ssub.s32 %s23, %s37
      %s99 = ssub.s32 %s22, %s41
      %s100 = sor.u32 %s98, %s99
      %p101 = scmp.eq.s32.totalorder %s100, 0
      %s103 = sadd.s32 %s102, 1
      %s104 = scalar_select %p101, %s102, %s103
      %p107 = pneg %p101
      %p108 = scmp.eq.s32.totalorder %s15, 1
      %p109 = por %p107, %p108
      %p110 = scmp.ne.s32.totalorder %s102, %s105
      %p111 = scmp.eq.s32.totalorder %s15, 0
      %p112 = por %p110, %p111
      %p113 = scmp.ne.s32.totalorder %s102, %s105
      %p114 = scmp.eq.s32.totalorder %s20, 1
      %p115 = por %p113, %p114
      %p116 = scmp.ne.s32.totalorder %s105, %s106
      %p117 = scmp.eq.s32.totalorder %s20, 0
      %p118 = por %p116, %p117
      %p119 = scmp.ne.s32.totalorder %s105, %s106
      %p120 = scmp.eq.s32.totalorder %s21, 1
      %p121 = por %p119, %p120
      %p123 = scmp.ne.s32.totalorder %s106, %s122
      %p124 = scmp.eq.s32.totalorder %s21, 0
      %p125 = por %p123, %p124
      %p126 = scmp.le.s32.totalorder 1, %s15
      %p127 = scmp.lt.s32.totalorder %s15, 3
      %p128 = pnand %p126, %p127
      %p129 = pneg %p128
      // Predicated region
      $region9: #{_sphere_matmul.1} parent=5 // pred_check
        _
      $region10: #{_sphere_matmul.1} parent=5 // pred_check_branch
        %131 = sbr.rel (%p128) target = $region12
      $region11: #{_sphere_matmul.1} parent=5 // pred_region
        %s132 = ssub.s32 %s15, 1
        // Predicated region
        $region13: #{_sphere_matmul.1} parent=11 // pred_check
          %p133 = pneg %p62
        $region14: #{_sphere_matmul.1} parent=11 // pred_check_branch
          %135 = sbr.rel (%p133) target = $region16
        $region15: #{_sphere_matmul.1} parent=11 // pred_region
          %s136 = smul.u32 2, %s26
          %s137 = smul.u32 2, %s27
          %s139 = ssub.s32 256, 256
          %140 = vsyncadd [#allocation3], %s139
          %s141 = smul.addr %s136, 2
          %s142 = sadd.s32 %s137, %s141
          %s143 = smul.addr %s142, 64
          %s144 = scalar_lea.hbm %s0, %s143
          %s145 = sshll.u32 [#allocation2], 4
          %s146 = int_to_ptr.vmem [resolvable:$true] %s145
          %151 = dma.hbm_to_vmem [thread:$0]  %s144, 256, %s146, [#allocation3], 128, 128, 8
        $region16: #{_sphere_matmul.1} parent=11 // pred_fallthru
          _
      $region12: #{_sphere_matmul.1} parent=5 // pred_fallthru
        _
      %p152 = scmp.lt.s32.totalorder %s15, 2
      // Predicated region
      $region17: #{_sphere_matmul.1} parent=5 // pred_check
        %p153 = pneg %p152
      $region18: #{_sphere_matmul.1} parent=5 // pred_check_branch
        %155 = sbr.rel (%p153) target = $region20
      $region19: #{_sphere_matmul.1} parent=5 // pred_region
        // Predicated region
        $region21: #{_sphere_matmul.1} parent=19 // pred_check
          %p156 = pneg %p84
        $region22: #{_sphere_matmul.1} parent=19 // pred_check_branch
          %158 = sbr.rel (%p156) target = $region24
        $region23: #{_sphere_matmul.1} parent=19 // pred_region
          %s159 = sand.u32 %s74, 1
          %s160 = scalar_lea.sflag [#allocation6], %s159
          %s161 = sand.u32 %s74, 1
          %s162 = smul.addr %s161, 128
          %s163 = scalar_lea.vmem [#allocation5], %s162
          %s164 = smul.u32 32, %s24
          %s166 = ssub.s32 2048, 2048
          %167 = vsyncadd %s160, %s166
          %s168 = smul.addr %s164, 2
          %s169 = sadd.s32 %s22, %s168
          %s170 = smul.addr %s169, 64
          %s171 = scalar_lea.hbm %s1, %s170
          %s172 = sshll.u32 %s163, 4
          %s173 = int_to_ptr.vmem [resolvable:$true] %s172
          %178 = dma.hbm_to_vmem [thread:$0]  %s171, 2048, %s173, %s160, 128, 64, 4
        $region24: #{_sphere_matmul.1} parent=19 // pred_fallthru
          _
      $region20: #{_sphere_matmul.1} parent=5 // pred_fallthru
        _
      %p179 = scmp.le.s32.totalorder 1, %s15
      %p180 = scmp.lt.s32.totalorder %s15, 3
      %p181 = pnand %p179, %p180
      %p182 = pneg %p181
      // Predicated region
      $region25: #{_sphere_matmul.1} parent=5 // pred_check
        _
      $region26: #{_sphere_matmul.1} parent=5 // pred_check_branch
        %184 = sbr.rel (%p181) target = $region28
      $region27: #{_sphere_matmul.1} parent=5 // pred_region
        %s185 = ssub.s32 %s15, 1
        // Predicated region
        $region29: #{_sphere_matmul.1} parent=27 // pred_check
          %p186 = pneg %p62
        $region30: #{_sphere_matmul.1} parent=27 // pred_check_branch
          %188 = sbr.rel (%p186) target = $region32
        $region31: #{_sphere_matmul.1} parent=27 // pred_region
          %189 = dma.done [#allocation3], 256
        $region32: #{_sphere_matmul.1} parent=27 // pred_fallthru
          _
        %s190 = sand.u32 %s77, 1
        %s191 = scalar_lea.sflag [#allocation6], %s190
        %s192 = sand.u32 %s77, 1
        %s193 = smul.addr %s192, 128
        %s194 = scalar_lea.vmem [#allocation5], %s193
        // Predicated region
        $region33: #{_sphere_matmul.1} parent=27 // pred_check
          %p195 = pneg %p90
        $region34: #{_sphere_matmul.1} parent=27 // pred_check_branch
          %197 = sbr.rel (%p195) target = $region36
        $region35: #{_sphere_matmul.1} parent=27 // pred_region
          %198 = dma.done %s191, 2048
        $region36: #{_sphere_matmul.1} parent=27 // pred_fallthru
          _
        %p199 = pneg %p62
        %p200 = pneg %p59
        %s201 = sand.u32 %s77, 1
        %s202 = scalar_lea.sflag [#allocation6], %s201
        %s203 = sand.u32 %s77, 1
        %s204 = smul.addr %s203, 128
        %s205 = scalar_lea.vmem [#allocation5], %s204
        %p206 = pneg %p90
        %p207 = pneg %p87
        %p208 = pneg %p118
        %p209 = pneg %p115
        %s210 = sand.u32 %s105, 1
        %s211 = scalar_lea.sflag [#allocation4], %s210
        %s212 = sand.u32 %s105, 1
        %s213 = smul.addr %s212, 16
        %s214 = scalar_lea.vmem [#allocation7], %s213
        %s215 = smul.u32 2, %s26
        %s216 = smul.u32 2, %s27
        %s217 = smul.u32 32, %s27
        %s218 = smul.u32 2, %s26
        %p220 = scmp.eq.s32.totalorder %s27, 0
        // Predicated region
        $region37: #{_sphere_matmul.1} parent=27 // pred_check
          %p221 = pneg %p220
        $region38: #{_sphere_matmul.1} parent=27 // pred_check_branch
          %223 = sbr.rel (%p221) target = $region40
        $region39: #{_sphere_matmul.1} parent=27 // pred_region
          %224 = vst [vmem:[%s214] sm:$0xff] 0.0
          %225 = vst [vmem:[%s214 + $0x8] sm:$0xff] 0.0
        $region40: #{_sphere_matmul.1} parent=27 // pred_fallthru
          _
        %v226 = vld [vmem:[%s214] sm:$0xff]
        %v227 = vld [vmem:[%s214 + $0x8] sm:$0xff]
        %v228 = vld [vmem:[#allocation2] sm:$0xff]
        %v229 = vld [vmem:[#allocation2 + $0x8] sm:$0xff]
        %v230 = vld [vmem:[%s194] sm:$0xf]
        %v231 = vld [vmem:[%s194 + $0x4] sm:$0xf]
        %v232 = vld [vmem:[%s194 + $0x8] sm:$0xf]
        %v233 = vld [vmem:[%s194 + $0xc] sm:$0xf]
        %v234 = vld [vmem:[%s194 + $0x10] sm:$0xf]
        %v235 = vld [vmem:[%s194 + $0x14] sm:$0xf]
        %v236 = vld [vmem:[%s194 + $0x18] sm:$0xf]
        %v237 = vld [vmem:[%s194 + $0x1c] sm:$0xf]
        %v238 = vld [vmem:[%s194 + $0x20] sm:$0xf]
        %v239 = vld [vmem:[%s194 + $0x24] sm:$0xf]
        %v240 = vld [vmem:[%s194 + $0x28] sm:$0xf]
        %v241 = vld [vmem:[%s194 + $0x2c] sm:$0xf]
        %v242 = vld [vmem:[%s194 + $0x30] sm:$0xf]
        %v243 = vld [vmem:[%s194 + $0x34] sm:$0xf]
        %v244 = vld [vmem:[%s194 + $0x38] sm:$0xf]
        %v245 = vld [vmem:[%s194 + $0x3c] sm:$0xf]
        %v246 = vld [vmem:[%s194 + $0x40] sm:$0xf]
        %v247 = vld [vmem:[%s194 + $0x44] sm:$0xf]
        %v248 = vld [vmem:[%s194 + $0x48] sm:$0xf]
        %v249 = vld [vmem:[%s194 + $0x4c] sm:$0xf]
        %v250 = vld [vmem:[%s194 + $0x50] sm:$0xf]
        %v251 = vld [vmem:[%s194 + $0x54] sm:$0xf]
        %v252 = vld [vmem:[%s194 + $0x58] sm:$0xf]
        %v253 = vld [vmem:[%s194 + $0x5c] sm:$0xf]
        %v254 = vld [vmem:[%s194 + $0x60] sm:$0xf]
        %v255 = vld [vmem:[%s194 + $0x64] sm:$0xf]
        %v256 = vld [vmem:[%s194 + $0x68] sm:$0xf]
        %v257 = vld [vmem:[%s194 + $0x6c] sm:$0xf]
        %v258 = vld [vmem:[%s194 + $0x70] sm:$0xf]
        %v259 = vld [vmem:[%s194 + $0x74] sm:$0xf]
        %v260 = vld [vmem:[%s194 + $0x78] sm:$0xf]
        %v261 = vld [vmem:[%s194 + $0x7c] sm:$0xf]
        %v264 = vunpack.c.l.b16 %v228
        %v265 = vunpack.c.h.b16 %v228
        %v266 = vunpack.c.l.b16 %v229
        %v267 = vunpack.c.h.b16 %v229
        %v268 = vpack.c.b16 %v266, %v264
        %v269 = vpack.c.b16 %v267, %v265
        %v304 = vunpack.c.l.b16 %v230
        %v305 = vunpack.c.l.b16 %v231
        %v306 = vunpack.c.l.b16 %v232
        %v307 = vunpack.c.l.b16 %v233
        %v308 = vunpack.c.l.b16 %v234
        %v309 = vunpack.c.l.b16 %v235
        %v310 = vunpack.c.l.b16 %v236
        %v311 = vunpack.c.l.b16 %v237
        %v312 = vunpack.c.l.b16 %v238
        %v313 = vunpack.c.l.b16 %v239
        %v314 = vunpack.c.l.b16 %v240
        %v315 = vunpack.c.l.b16 %v241
        %v316 = vunpack.c.l.b16 %v242
        %v317 = vunpack.c.l.b16 %v243
        %v318 = vunpack.c.l.b16 %v244
        %v319 = vunpack.c.l.b16 %v245
        %v320 = vunpack.c.l.b16 %v246
        %v321 = vunpack.c.l.b16 %v247
        %v322 = vunpack.c.l.b16 %v248
        %v323 = vunpack.c.l.b16 %v249
        %v324 = vunpack.c.l.b16 %v250
        %v325 = vunpack.c.l.b16 %v251
        %v326 = vunpack.c.l.b16 %v252
        %v327 = vunpack.c.l.b16 %v253
        %v328 = vunpack.c.l.b16 %v254
        %v329 = vunpack.c.l.b16 %v255
        %v330 = vunpack.c.l.b16 %v256
        %v331 = vunpack.c.l.b16 %v257
        %v332 = vunpack.c.l.b16 %v258
        %v333 = vunpack.c.l.b16 %v259
        %v334 = vunpack.c.l.b16 %v260
        %v335 = vunpack.c.l.b16 %v261
        %v336 = vpack.c.b16 %v305, %v304
        %v337 = vpack.c.b16 %v307, %v306
        %v338 = vpack.c.b16 %v309, %v308
        %v339 = vpack.c.b16 %v311, %v310
        %v340 = vpack.c.b16 %v313, %v312
        %v341 = vpack.c.b16 %v315, %v314
        %v342 = vpack.c.b16 %v317, %v316
        %v343 = vpack.c.b16 %v319, %v318
        %v344 = vpack.c.b16 %v321, %v320
        %v345 = vpack.c.b16 %v323, %v322
        %v346 = vpack.c.b16 %v325, %v324
        %v347 = vpack.c.b16 %v327, %v326
        %v348 = vpack.c.b16 %v329, %v328
        %v349 = vpack.c.b16 %v331, %v330
        %v350 = vpack.c.b16 %v333, %v332
        %v351 = vpack.c.b16 %v335, %v334
        %368 = vmatprep.subr.bf16.mxu0 0
        %369 = vmatpush1.bf16.msra.mxu0 %v336
        %370 = vmatprep.subr.bf16.mxu0 0
        %371 = vmatpush1.bf16.msra.mxu0 %v337
        %372 = vmatprep.subr.bf16.mxu0 0
        %373 = vmatpush1.bf16.msra.mxu0 %v338
        %374 = vmatprep.subr.bf16.mxu0 0
        %375 = vmatpush1.bf16.msra.mxu0 %v339
        %376 = vmatprep.subr.bf16.mxu0 0
        %377 = vmatpush1.bf16.msra.mxu0 %v340
        %378 = vmatprep.subr.bf16.mxu0 0
        %379 = vmatpush1.bf16.msra.mxu0 %v341
        %380 = vmatprep.subr.bf16.mxu0 0
        %381 = vmatpush1.bf16.msra.mxu0 %v342
        %382 = vmatprep.subr.bf16.mxu0 0
        %383 = vmatpush1.bf16.msra.mxu0 %v343
        %384 = vmatprep.subr.bf16.mxu0 0
        %385 = vmatpush1.bf16.msra.mxu0 %v344
        %386 = vmatprep.subr.bf16.mxu0 0
        %387 = vmatpush1.bf16.msra.mxu0 %v345
        %388 = vmatprep.subr.bf16.mxu0 0
        %389 = vmatpush1.bf16.msra.mxu0 %v346
        %390 = vmatprep.subr.bf16.mxu0 0
        %391 = vmatpush1.bf16.msra.mxu0 %v347
        %392 = vmatprep.subr.bf16.mxu0 0
        %393 = vmatpush1.bf16.msra.mxu0 %v348
        %394 = vmatprep.subr.bf16.mxu0 0
        %395 = vmatpush1.bf16.msra.mxu0 %v349
        %396 = vmatprep.subr.bf16.mxu0 0
        %397 = vmatpush1.bf16.msra.mxu0 %v350
        %398 = vmatprep.subr.bf16.mxu0 0
        %399 = vmatpush1.bf16.msra.mxu0 %v351
        %400 = vmatprep.mubr.bf16.mxu0 %v269
        %401 = vmatmul.mubr.bf16.gmra.mrb[0].mxu0 %v268
        %v402 = vpop.f32.mrb[0].mxu0
        %v403 = vadd.f32 0.0, %v402
        %v404 = vpop.f32.mrb[0].mxu0
        %v405 = vpop.f32.mrb[0].mxu0
        %v406 = vadd.f32 0.0, %v405
        %v407 = vpop.f32.mrb[0].mxu0
        %408 = vdwg.mxu0
        %v409 = vadd.f32 %v226, %v403
        %v410 = vadd.f32 %v227, %v406
        %411 = vst [vmem:[%s214] sm:$0xff] %v409
        %412 = vst [vmem:[%s214 + $0x8] sm:$0xff] %v410
        %s413 = sand.u32 %s105, 1
        %s414 = scalar_lea.sflag [#allocation4], %s413
        %s415 = sand.u32 %s105, 1
        %s416 = smul.addr %s415, 16
        %s417 = scalar_lea.vmem [#allocation7], %s416
        // Predicated region
        $region41: #{_sphere_matmul.1} parent=27 // pred_check
          %p418 = pneg %p115
        $region42: #{_sphere_matmul.1} parent=27 // pred_check_branch
          %420 = sbr.rel (%p418) target = $region44
        $region43: #{_sphere_matmul.1} parent=27 // pred_region
          %s421 = smul.u32 2, %s26
          %s423 = ssub.s32 256, 256
          %424 = vsyncadd %s414, %s423
          %s425 = smul.addr %s421, 2
          %s426 = sadd.s32 %s25, %s425
          %s427 = smul.addr %s426, 128
          %s428 = scalar_lea.hbm %s2, %s427
          %s429 = sshll.u32 %s417, 4
          %s430 = int_to_ptr.vmem [resolvable:$true] %s429
          %435 = dma.vmem_to_hbm [thread:$0]  %s430, 256, %s428, %s414, 128, 256, 8
        $region44: #{_sphere_matmul.1} parent=27 // pred_fallthru
          _
      $region28: #{_sphere_matmul.1} parent=5 // pred_fallthru
        _
      %p436 = scmp.le.s32.totalorder 2, %s15
      // Predicated region
      $region45: #{_sphere_matmul.1} parent=5 // pred_check
        %p437 = pneg %p436
      $region46: #{_sphere_matmul.1} parent=5 // pred_check_branch
        %439 = sbr.rel (%p437) target = $region48
      $region47: #{_sphere_matmul.1} parent=5 // pred_region
        %s440 = ssub.s32 %s15, 2
        // Predicated region
        $region49: #{_sphere_matmul.1} parent=47 // pred_check
          %p441 = pneg %p121
        $region50: #{_sphere_matmul.1} parent=47 // pred_check_branch
          %443 = sbr.rel (%p441) target = $region52
        $region51: #{_sphere_matmul.1} parent=47 // pred_region
          %s444 = sand.u32 %s106, 1
          %s445 = scalar_lea.sflag [#allocation4], %s444
          %s446 = sand.u32 %s106, 1
          %s447 = smul.addr %s446, 16
          %s448 = scalar_lea.vmem [#allocation7], %s447
          %449 = dma.done %s445, 256
        $region52: #{_sphere_matmul.1} parent=47 // pred_fallthru
          _
      $region48: #{_sphere_matmul.1} parent=5 // pred_fallthru
        _
    $region6: #{_sphere_matmul.1} parent=1 // loop_footer
      %s19 = sadd.s32 1, %s15
    $region7: #{_sphere_matmul.1} parent=1 // loop_footer_branch
      %14 = sbr.rel target = $region3
    $region8: #{_sphere_matmul.1} parent=1 // loop_exit
      _
    %450 = vsyncpa [#allocation3], 1
    %s451 = scalar_lea.sflag [#allocation3], 1
    %452 = vsyncpa %s451, 1
    %453 = vsyncpa [#allocation6], 1
    %s454 = scalar_lea.sflag [#allocation6], 1
    %455 = vsyncpa %s454, 1
    %456 = vsyncpa [#allocation4], 1
    %s457 = scalar_lea.sflag [#allocation4], 1
    %458 = vsyncpa %s457, 1

</llo_original>
